<compile_context>
chip_gen: v6e
topology: v6e:2x2x1
jax: 0.10.0
libtpu: 0.0.40
codegen_flags: <defaults>
</compile_context>

<pallas_src>
import jax
import jax.numpy as jnp
from jax.experimental import pallas as pl
from jax.experimental.pallas import tpu as pltpu


# --------------------------------------------------------------------------- #
# helpers
# --------------------------------------------------------------------------- #
def _vmem_capacity_bytes():
    """Physical VMEM per core; conservative fallback if the query is absent."""
    try:
        info = pltpu.get_tpu_info()
        cap = getattr(info, "vmem_capacity_bytes", None)
        if cap:
            return int(cap)
    except Exception:
        pass
    return 64 * 1024 * 1024  # v7x per-TensorCore VMEM (safe on v5e/v6e too)


def _pick_hw_tile(hw, c, itemsize, budget):
    """Largest HW tile that divides hw, keeps the double-buffered x/out blocks
    within `budget`, and is a multiple of 128 when possible (unmasked vst)."""
    max_tile = max(128, budget // (4 * c * itemsize))
    best = 0
    t = 128
    while t <= min(hw, max_tile):
        if hw % t == 0:
            best = t
        t += 128
    if best:
        return best
    # No 128-aligned divisor fits: fall back to the largest divisor that does.
    for t in range(min(hw, max_tile), 0, -1):
        if hw % t == 0:
            return t
    return hw


def _mosaic_params(semantics, block_bytes, cap):
    """dimension_semantics + an explicit scoped-VMEM limit sized to the blocks
    (double-buffered in + out) with headroom, capped below physical VMEM."""
    needed = 4 * block_bytes + (4 << 20)
    limit = int(min(max(needed, 32 << 20), (cap * 7) // 8))
    return pltpu.CompilerParams(dimension_semantics=semantics,
                                vmem_limit_bytes=limit)


def _gate_from_pooled_sum(pooled_sum, w_kc):
    """pooled_sum: (1, C) f32 spatial *sum*; w_kc: (K, C) f32 with 1/HW folded.
    Returns sigmoid of the depthwise channel-neighborhood conv, shape (1, C)."""
    k, c = w_kc.shape
    pad = (k - 1) // 2
    if pad > 0:
        zpad = jnp.zeros((1, pad), jnp.float32)
        p_pad = jnp.concatenate([zpad, pooled_sum, zpad], axis=-1)  # (1, C+K-1)
    else:
        p_pad = pooled_sum
    z = jnp.zeros((1, c), jnp.float32)
    for j in range(k):                        # K is tiny & static -> unrolled
        z = z + w_kc[j:j + 1, :] * p_pad[:, j:j + c]
    return jax.nn.sigmoid(z)                  # (1, C) f32


# --------------------------------------------------------------------------- #
# kernels
# --------------------------------------------------------------------------- #
def _eca_fused_kernel(x_ref, w_ref, o_ref):
    """Single-pass: pool -> gate -> scale on one (1, C, HW) block."""
    # Pooled reduction in f32 (short-lived temp); everything bulk stays in the
    # input dtype so bf16 inputs never materialize an f32 copy for the store.
    pooled = jnp.sum(x_ref[...].astype(jnp.float32), axis=-1)       # (1, C)
    gate = _gate_from_pooled_sum(pooled, w_ref[...])                # (1, C) f32
    # Exactly one store pass over the block (v5e has a single vst slot).
    o_ref[...] = x_ref[...] * gate.astype(o_ref.dtype)[:, :, None]


def _eca_pool_gate_kernel(x_ref, w_ref, g_ref, acc_ref):
    """Phase 1 (tiled path): accumulate spatial sum over HW tiles, then emit
    the per-channel gate on the last tile.  x_ref: (1, C, Thw), g_ref: (1,1,C)."""
    t = pl.program_id(1)

    @pl.when(t == 0)
    def _init():
        acc_ref[...] = jnp.zeros_like(acc_ref)

    acc_ref[...] += jnp.sum(x_ref[...].astype(jnp.float32), axis=-1)  # (1, C)

    @pl.when(t == pl.num_programs(1) - 1)
    def _finalize():
        gate = _gate_from_pooled_sum(acc_ref[...], w_ref[...])        # (1, C)
        g_ref[...] = gate[:, None, :]                                 # (1,1,C)


def _eca_scale_kernel(x_ref, g_ref, o_ref):
    """Phase 2 (tiled path): pure lane-dense broadcast multiply.
    x_ref/o_ref: (1, C, Thw); g_ref: (1, C, 1) f32."""
    o_ref[...] = x_ref[...] * g_ref[...].astype(o_ref.dtype)


# --------------------------------------------------------------------------- #
# wrapper
# --------------------------------------------------------------------------- #
def eca_forward(x_nchw, weight, k_size, *, vmem_budget_bytes=None):
    """weight: Conv1d weight of shape (C, 1, k_size) (groups=C, bias=False)."""
    b, c, h, w = x_nchw.shape
    hw = h * w
    x_flat = x_nchw.reshape(b, c, hw)
    # (K, C) f32, 1/HW folded in (pool becomes a plain sum, no divide).
    w_kc = (jnp.asarray(weight).reshape(c, k_size).T.astype(jnp.float32)
            / jnp.float32(hw))

    itemsize = jnp.dtype(x_nchw.dtype).itemsize
    cap = _vmem_capacity_bytes()
    if vmem_budget_bytes is None:
        vmem_budget_bytes = (cap * 3) // 4

    # Fused path needs the double-buffered in + out per-batch blocks resident.
    fused_block_bytes = 4 * c * hw * itemsize + 4 * c * k_size * 4
    use_fused = fused_block_bytes <= vmem_budget_bytes
    # Note: on v7x with very small batch, forcing the tiled path (smaller
    # vmem_budget_bytes) exposes a (B, n_hw) parallel grid for both TensorCores
    # at the cost of ~1.5x HBM traffic; default keeps minimal-traffic fused.

    if use_fused:
        out = pl.pallas_call(
            _eca_fused_kernel,
            out_shape=jax.ShapeDtypeStruct((b, c, hw), x_nchw.dtype),
            grid_spec=pltpu.PrefetchScalarGridSpec(
                num_scalar_prefetch=0,
                grid=(b,),
                in_specs=[
                    pl.BlockSpec((1, c, hw), lambda i: (i, 0, 0)),
                    pl.BlockSpec((k_size, c), lambda i: (0, 0)),
                ],
                out_specs=pl.BlockSpec((1, c, hw), lambda i: (i, 0, 0)),
            ),
            compiler_params=_mosaic_params(("parallel",),
                                           c * hw * itemsize, cap),
        )(x_flat, w_kc)
        return out.reshape(b, c, h, w)

    # ---- tiled two-phase path -------------------------------------------- #
    tile = _pick_hw_tile(hw, c, itemsize, vmem_budget_bytes)
    n_hw = hw // tile
    block_bytes = c * tile * itemsize

    # Phase 1: pooled sum over HW tiles (reduction axis last, "arbitrary"),
    # gate emitted once per batch element as a tiny (B, 1, C) f32 array.
    gate_b1c = pl.pallas_call(
        _eca_pool_gate_kernel,
        out_shape=jax.ShapeDtypeStruct((b, 1, c), jnp.float32),
        grid_spec=pltpu.PrefetchScalarGridSpec(
            num_scalar_prefetch=0,
            grid=(b, n_hw),
            in_specs=[
                pl.BlockSpec((1, c, tile), lambda ib, it: (ib, 0, it)),
                pl.BlockSpec((k_size, c), lambda ib, it: (0, 0)),
            ],
            out_specs=pl.BlockSpec((1, 1, c), lambda ib, it: (ib, 0, 0)),
            scratch_shapes=[pltpu.VMEM((1, c), jnp.float32)],
        ),
        compiler_params=_mosaic_params(("parallel", "arbitrary"),
                                       block_bytes, cap),
    )(x_flat, w_kc)

    # Tiny relayout in XLA so the scale kernel sees a per-channel (C, 1)
    # column that broadcasts over lanes with no in-kernel transpose.
    gate_bc1 = jnp.transpose(gate_b1c, (0, 2, 1))               # (B, C, 1)

    # Phase 2: lane-dense broadcast multiply; fully parallel grid (megacore).
    out = pl.pallas_call(
        _eca_scale_kernel,
        out_shape=jax.ShapeDtypeStruct((b, c, hw), x_nchw.dtype),
        grid_spec=pltpu.PrefetchScalarGridSpec(
            num_scalar_prefetch=0,
            grid=(b, n_hw),
            in_specs=[
                pl.BlockSpec((1, c, tile), lambda ib, it: (ib, 0, it)),
                pl.BlockSpec((1, c, 1), lambda ib, it: (ib, 0, 0)),
            ],
            out_specs=pl.BlockSpec((1, c, tile), lambda ib, it: (ib, 0, it)),
        ),
        compiler_params=_mosaic_params(("parallel", "parallel"),
                                       block_bytes, cap),
    )(x_flat, gate_bc1)
    return out.reshape(b, c, h, w)


# --------------------------------------------------------------------------- #
# pure-JAX reference (matches the PyTorch forward)
# --------------------------------------------------------------------------- #
def eca_reference(x, weight, k_size):
    b, c, h, w = x.shape
    pad = (k_size - 1) // 2
    pooled = jnp.mean(x.astype(jnp.float32), axis=(2, 3))          # (b, c)
    p_pad = jnp.pad(pooled, ((0, 0), (pad, pad)))
    w2d = jnp.asarray(weight).reshape(c, k_size).astype(jnp.float32)
    z = jnp.zeros((b, c), jnp.float32)
    for j in range(k_size):
        z = z + w2d[:, j][None, :] * p_pad[:, j:j + c]
    gate = jax.nn.sigmoid(z)
    return (x * gate.astype(x.dtype)[:, :, None, None]).astype(x.dtype)


if __name__ == "__main__":
    key = jax.random.PRNGKey(0)
    kx, kw = jax.random.split(key)

    b, c, h, w = 2, 8, 16, 16
    k_size = 3  # odd (as in ECA) so unfold length == C

    x = jax.random.normal(kx, (b, c, h, w), dtype=jnp.float32)
    bound = 1.0 / (k_size ** 0.5)
    weight = jax.random.uniform(kw, (c, 1, k_size), dtype=jnp.float32,
                                minval=-bound, maxval=bound)

    ref = eca_reference(x, weight, k_size)

    # Path 1: fused single-pass kernel (per-batch block fits VMEM).
    out_fused = jax.block_until_ready(eca_forward(x, weight, k_size))
    assert out_fused.shape == x.shape and out_fused.dtype == x.dtype
    assert jnp.allclose(out_fused, ref, atol=1e-5, rtol=1e-5), \
        "fused path mismatch vs reference"

    # Path 2: force the HW-tiled two-kernel path (pool+gate, then scale) by
    # shrinking the VMEM budget below the fused block size.
    out_tiled = jax.block_until_ready(
        eca_forward(x, weight, k_size, vmem_budget_bytes=16 * 1024))
    assert out_tiled.shape == x.shape and out_tiled.dtype == x.dtype
    assert jnp.allclose(out_tiled, ref, atol=1e-5, rtol=1e-5), \
        "tiled path mismatch vs reference"

    print("KERNEL_OK")
</pallas_src>

<mosaic_0001>
module attributes {stable_mosaic.version = 11 : i64} {
  func.func @_eca_fused_kernel(%arg0: i32, %arg1: memref<1x8x256xf32, #tpu.memory_space<vmem>>, %arg2: memref<3x8xf32, #tpu.memory_space<vmem>>, %arg3: memref<1x8x256xf32, #tpu.memory_space<vmem>>) attributes {dimension_semantics = [#tpu.dimension_semantics<parallel>], iteration_bounds = array<i64: 2>, scalar_prefetch = 0 : i64, scratch_operands = 0 : i64, tpu.core_type = #tpu.core_type<tc>, window_params = [{transform_indices = @transform_0, window_bounds = array<i64: 1, 8, 256>}, {pipeline_mode = #tpu.pipeline_mode<synchronous>, transform_indices = @transform_1, window_bounds = array<i64: 3, 8>}, {transform_indices = @transform_2, window_bounds = array<i64: 1, 8, 256>}]} {
    %c0 = arith.constant 0 : index
    %c0_0 = arith.constant 0 : index
    %c0_1 = arith.constant 0 : index
    %0 = vector.load %arg1[%c0, %c0_0, %c0_1] : memref<1x8x256xf32, #tpu.memory_space<vmem>>, vector<1x8x256xf32>
    %cst = arith.constant dense<0.000000e+00> : vector<1x8xf32>
    %1 = vector.multi_reduction <add>, %0, %cst [2] : vector<1x8x256xf32> to vector<1x8xf32>
    %c0_2 = arith.constant 0 : index
    %c0_3 = arith.constant 0 : index
    %2 = vector.load %arg2[%c0_2, %c0_3] : memref<3x8xf32, #tpu.memory_space<vmem>>, vector<3x8xf32>
    %cst_4 = arith.constant 0.000000e+00 : f32
    %3 = vector.broadcast %cst_4 : f32 to vector<1x1xf32>
    %4 = tpu.concatenate %3, %1, %3 in 1 : vector<1x1xf32>, vector<1x8xf32>, vector<1x1xf32> -> vector<1x10xf32>
    %cst_5 = arith.constant 0.000000e+00 : f32
    %5 = vector.broadcast %cst_5 : f32 to vector<1x8xf32>
    %6 = vector.extract_strided_slice %2 {offsets = [0, 0], sizes = [1, 8], strides = [1, 1]} : vector<3x8xf32> to vector<1x8xf32>
    %7 = vector.extract_strided_slice %4 {offsets = [0, 0], sizes = [1, 8], strides = [1, 1]} : vector<1x10xf32> to vector<1x8xf32>
    %8 = arith.mulf %6, %7 : vector<1x8xf32>
    %9 = arith.addf %5, %8 : vector<1x8xf32>
    %10 = vector.extract_strided_slice %2 {offsets = [1, 0], sizes = [1, 8], strides = [1, 1]} : vector<3x8xf32> to vector<1x8xf32>
    %11 = vector.extract_strided_slice %4 {offsets = [0, 1], sizes = [1, 8], strides = [1, 1]} : vector<1x10xf32> to vector<1x8xf32>
    %12 = arith.mulf %10, %11 : vector<1x8xf32>
    %13 = arith.addf %9, %12 : vector<1x8xf32>
    %14 = vector.extract_strided_slice %2 {offsets = [2, 0], sizes = [1, 8], strides = [1, 1]} : vector<3x8xf32> to vector<1x8xf32>
    %15 = vector.extract_strided_slice %4 {offsets = [0, 2], sizes = [1, 8], strides = [1, 1]} : vector<1x10xf32> to vector<1x8xf32>
    %16 = arith.mulf %14, %15 : vector<1x8xf32>
    %17 = arith.addf %13, %16 : vector<1x8xf32>
    %18 = arith.negf %17 : vector<1x8xf32>
    %19 = math.exp %18 : vector<1x8xf32>
    %cst_6 = arith.constant 1.000000e+00 : f32
    %20 = vector.broadcast %cst_6 : f32 to vector<1x8xf32>
    %21 = arith.addf %20, %19 : vector<1x8xf32>
    %22 = arith.divf %20, %21 : vector<1x8xf32>
    %c0_7 = arith.constant 0 : index
    %c0_8 = arith.constant 0 : index
    %c0_9 = arith.constant 0 : index
    %23 = vector.load %arg1[%c0_7, %c0_8, %c0_9] : memref<1x8x256xf32, #tpu.memory_space<vmem>>, vector<1x8x256xf32>
    %24 = vector.shape_cast %22 : vector<1x8xf32> to vector<1x8x1xf32>
    %25 = vector.broadcast %24 : vector<1x8x1xf32> to vector<1x8x256xf32>
    %26 = arith.mulf %23, %25 : vector<1x8x256xf32>
    %c0_10 = arith.constant 0 : index
    %c0_11 = arith.constant 0 : index
    %c0_12 = arith.constant 0 : index
    %27 = vector.load %arg3[%c0_10, %c0_11, %c0_12] : memref<1x8x256xf32, #tpu.memory_space<vmem>>, vector<1x8x256xf32>
    tpu.vector_store %arg3[%c0_10, %c0_11, %c0_12], %26 {strides = array<i32>} : memref<1x8x256xf32, #tpu.memory_space<vmem>>, vector<1x8x256xf32>,
    return
  }
  func.func @transform_0(%arg0: i32) -> (i32, i32, i32) {
    %c0_i32 = arith.constant 0 : i32
    %c0_i32_0 = arith.constant 0 : i32
    %c0_i32_1 = arith.constant 0 : i32
    return %arg0, %c0_i32, %c0_i32_0 : i32, i32, i32
  }
  func.func @transform_1(%arg0: i32) -> (i32, i32) {
    %c0_i32 = arith.constant 0 : i32
    %c0_i32_0 = arith.constant 0 : i32
    %c0_i32_1 = arith.constant 0 : i32
    return %c0_i32, %c0_i32_0 : i32, i32
  }
  func.func @transform_2(%arg0: i32) -> (i32, i32, i32) {
    %c0_i32 = arith.constant 0 : i32
    %c0_i32_0 = arith.constant 0 : i32
    %c0_i32_1 = arith.constant 0 : i32
    return %arg0, %c0_i32, %c0_i32_0 : i32, i32, i32
  }
}

</mosaic_0001>

<llo_original>
// kernel: tpu_custom_call.1
$region0: #{tpu_custom_call.1}
  #allocation0 [shape = 'u32[]', space=smem, size = 0x4, offset = 0x4, fixed_abs, tag = 'smem constant byte address 0x4 - core index']
  #allocation1 [shape = 'u32[144,128]{1,0:T(1,128)}', space=vmem, size = 0x12000, scoped, tag = 'internal scratch']
  %s0 = inlined_call_operand.hbm [shape: f32[2,8,256], index: 0, kind: input, shape index: {}]
  %s1 = inlined_call_operand.hbm [shape: f32[3,8], index: 1, kind: input, shape index: {}]
  %s2 = inlined_call_operand.hbm [shape: f32[2,8,256], index: 2, kind: output, shape index: {}]
  %s3 = sld [smem:[#allocation0]]
  $region49: #{tpu_custom_call.1} parent=0
    _
  %s5 = ssub.s32 1, %s3
  %s6 = scalar_select 0, %s5, %s3
  $region1: #{tpu_custom_call.1} parent=0
    #allocation2 [shape = 'u8[16384]{0}', space=vmem, size = 0x4000, scoped, tag = 'input window, operand 0']
    #allocation3 [shape = 's32[2]{0}', space=sflag, size = 0x8, scoped, tag = 'scoped memory for tpu_custom_call.1']
    #allocation4 [shape = 's32[2]{0}', space=sflag, size = 0x8, scoped, tag = 'scoped memory for tpu_custom_call.1']
    #allocation5 [shape = 'u8[2048]{0}', space=vmem, size = 0x800, scoped, tag = 'input window, operand 1, single buffered']
    #allocation6 [shape = 's32[1]{0}', space=sflag, size = 0x4, scoped, tag = 'scoped memory for tpu_custom_call.1']
    #allocation7 [shape = 'u8[16384]{0}', space=vmem, size = 0x4000, scoped, tag = 'output window, operand 0']
    %7 = vsyncpa [#allocation3], 0
    %s8 = scalar_lea.sflag [#allocation3], 1
    %9 = vsyncpa %s8, 0
    %10 = vsyncpa [#allocation6], 0
    %11 = vsyncpa [#allocation4], 0
    %s12 = scalar_lea.sflag [#allocation4], 1
    %13 = vsyncpa %s12, 0
    loop: start=0, step=1, limit=4
    $region2: #{tpu_custom_call.1} parent=1 // loop_pre_header
      _
    $region3: #{tpu_custom_call.1} parent=1 // loop_header
      %s15 = sphi 0, %s19
      %p16 = scmp.ge.s32.totalorder %s15, 4
      %s25 = sphi 0, %s27
      %s28 = sphi 0, %s25
      %s29 = sphi 0, %s28
      %s45 = sphi 0, %s29
      %s49 = sphi 0, %s49
      %s51 = sphi 0, %s49
      %s52 = sphi 0, %s51
      %s66 = sphi 0, %s52
      %s72 = sphi 0, %s74
      %s75 = sphi 0, %s72
      %s76 = sphi 0, %s75
      %s92 = sphi 0, %s76
    $region4: #{tpu_custom_call.1} parent=1 // loop_header_branch
      %18 = sbr.rel (%p16) target = $region8
    $region5: #{tpu_custom_call.1} parent=1 // loop_body
      %s20 = ssub.s32 %s15, 1
      %s21 = ssub.s32 %s15, 2
      %s22 = sadd.s32 %s15, 1
      %s23 = ssub.s32 %s15, %s22
      %p24 = scmp.eq.s32.totalorder %s23, 0
      %s26 = sadd.s32 %s25, 1
      %s27 = scalar_select %p24, %s25, %s26
      %p30 = pneg %p24
      %p31 = scmp.eq.s32.totalorder %s15, 1
      %p32 = por %p30, %p31
      %p33 = scmp.ne.s32.totalorder %s25, %s28
      %p34 = scmp.eq.s32.totalorder %s15, 0
      %p35 = por %p33, %p34
      %p36 = scmp.ne.s32.totalorder %s25, %s28
      %p37 = scmp.eq.s32.totalorder %s20, 1
      %p38 = por %p36, %p37
      %p39 = scmp.ne.s32.totalorder %s28, %s29
      %p40 = scmp.eq.s32.totalorder %s20, 0
      %p41 = por %p39, %p40
      %p42 = scmp.ne.s32.totalorder %s28, %s29
      %p43 = scmp.eq.s32.totalorder %s21, 1
      %p44 = por %p42, %p43
      %p46 = scmp.ne.s32.totalorder %s29, %s45
      %p47 = scmp.eq.s32.totalorder %s21, 0
      %p48 = por %p46, %p47
      %s50 = sadd.s32 %s49, 1
      %p53 = scmp.eq.s32.totalorder %s15, 1
      %p54 = scmp.ne.s32.totalorder %s49, %s51
      %p55 = scmp.eq.s32.totalorder %s15, 0
      %p56 = por %p54, %p55
      %p57 = scmp.ne.s32.totalorder %s49, %s51
      %p58 = scmp.eq.s32.totalorder %s20, 1
      %p59 = por %p57, %p58
      %p60 = scmp.ne.s32.totalorder %s51, %s52
      %p61 = scmp.eq.s32.totalorder %s20, 0
      %p62 = por %p60, %p61
      %p63 = scmp.ne.s32.totalorder %s51, %s52
      %p64 = scmp.eq.s32.totalorder %s21, 1
      %p65 = por %p63, %p64
      %p67 = scmp.ne.s32.totalorder %s52, %s66
      %p68 = scmp.eq.s32.totalorder %s21, 0
      %p69 = por %p67, %p68
      %s70 = ssub.s32 %s15, %s22
      %p71 = scmp.eq.s32.totalorder %s70, 0
      %s73 = sadd.s32 %s72, 1
      %s74 = scalar_select %p71, %s72, %s73
      %p77 = pneg %p71
      %p78 = scmp.eq.s32.totalorder %s15, 1
      %p79 = por %p77, %p78
      %p80 = scmp.ne.s32.totalorder %s72, %s75
      %p81 = scmp.eq.s32.totalorder %s15, 0
      %p82 = por %p80, %p81
      %p83 = scmp.ne.s32.totalorder %s72, %s75
      %p84 = scmp.eq.s32.totalorder %s20, 1
      %p85 = por %p83, %p84
      %p86 = scmp.ne.s32.totalorder %s75, %s76
      %p87 = scmp.eq.s32.totalorder %s20, 0
      %p88 = por %p86, %p87
      %p89 = scmp.ne.s32.totalorder %s75, %s76
      %p90 = scmp.eq.s32.totalorder %s21, 1
      %p91 = por %p89, %p90
      %p93 = scmp.ne.s32.totalorder %s76, %s92
      %p94 = scmp.eq.s32.totalorder %s21, 0
      %p95 = por %p93, %p94
      %p96 = scmp.le.s32.totalorder 1, %s15
      %p97 = scmp.lt.s32.totalorder %s15, 3
      %p98 = pnand %p96, %p97
      %p99 = pneg %p98
      // Predicated region
      $region9: #{tpu_custom_call.1} parent=5 // pred_check
        _
      $region10: #{tpu_custom_call.1} parent=5 // pred_check_branch
        %101 = sbr.rel (%p98) target = $region12
      $region11: #{tpu_custom_call.1} parent=5 // pred_region
        %s102 = ssub.s32 %s15, 1
        // Predicated region
        $region13: #{tpu_custom_call.1} parent=11 // pred_check
          %p103 = pneg %p62
        $region14: #{tpu_custom_call.1} parent=11 // pred_check_branch
          %105 = sbr.rel (%p103) target = $region16
        $region15: #{tpu_custom_call.1} parent=11 // pred_region
          %s107 = ssub.s32 64, 64
          %108 = vsyncadd [#allocation6], %s107
          %s110 = sshll.u32 [#allocation5], 4
          %s111 = int_to_ptr.vmem [resolvable:$true] %s110
          %113 = dma.hbm_to_vmem [thread:$0]  %s1, 64, %s111, [#allocation6]
        $region16: #{tpu_custom_call.1} parent=11 // pred_fallthru
          _
      $region12: #{tpu_custom_call.1} parent=5 // pred_fallthru
        _
      %p114 = scmp.lt.s32.totalorder %s15, 2
      // Predicated region
      $region17: #{tpu_custom_call.1} parent=5 // pred_check
        %p115 = pneg %p114
      $region18: #{tpu_custom_call.1} parent=5 // pred_check_branch
        %117 = sbr.rel (%p115) target = $region20
      $region19: #{tpu_custom_call.1} parent=5 // pred_region
        // Predicated region
        $region21: #{tpu_custom_call.1} parent=19 // pred_check
          %p118 = pneg %p35
        $region22: #{tpu_custom_call.1} parent=19 // pred_check_branch
          %120 = sbr.rel (%p118) target = $region24
        $region23: #{tpu_custom_call.1} parent=19 // pred_region
          %s121 = sand.u32 %s25, 1
          %s122 = scalar_lea.sflag [#allocation3], %s121
          %s123 = sand.u32 %s25, 1
          %s124 = smul.addr %s123, 16
          %s125 = scalar_lea.vmem [#allocation2], %s124
          %s127 = ssub.s32 256, 256
          %128 = vsyncadd %s122, %s127
          %s129 = smul.addr %s15, 2
          %s130 = smul.addr %s129, 128
          %s131 = scalar_lea.hbm %s0, %s130
          %s133 = sshll.u32 %s125, 4
          %s134 = int_to_ptr.vmem [resolvable:$true] %s133
          %136 = dma.hbm_to_vmem [thread:$0]  %s131, 256, %s134, %s122
        $region24: #{tpu_custom_call.1} parent=19 // pred_fallthru
          _
      $region20: #{tpu_custom_call.1} parent=5 // pred_fallthru
        _
      %p137 = scmp.le.s32.totalorder 1, %s15
      %p138 = scmp.lt.s32.totalorder %s15, 3
      %p139 = pnand %p137, %p138
      %p140 = pneg %p139
      // Predicated region
      $region25: #{tpu_custom_call.1} parent=5 // pred_check
        _
      $region26: #{tpu_custom_call.1} parent=5 // pred_check_branch
        %142 = sbr.rel (%p139) target = $region28
      $region27: #{tpu_custom_call.1} parent=5 // pred_region
        %s143 = ssub.s32 %s15, 1
        %s144 = sand.u32 %s28, 1
        %s145 = scalar_lea.sflag [#allocation3], %s144
        %s146 = sand.u32 %s28, 1
        %s147 = smul.addr %s146, 16
        %s148 = scalar_lea.vmem [#allocation2], %s147
        // Predicated region
        $region29: #{tpu_custom_call.1} parent=27 // pred_check
          %p149 = pneg %p41
        $region30: #{tpu_custom_call.1} parent=27 // pred_check_branch
          %151 = sbr.rel (%p149) target = $region32
        $region31: #{tpu_custom_call.1} parent=27 // pred_region
          %152 = dma.done %s145, 256
        $region32: #{tpu_custom_call.1} parent=27 // pred_fallthru
          _
        // Predicated region
        $region33: #{tpu_custom_call.1} parent=27 // pred_check
          %p153 = pneg %p62
        $region34: #{tpu_custom_call.1} parent=27 // pred_check_branch
          %155 = sbr.rel (%p153) target = $region36
        $region35: #{tpu_custom_call.1} parent=27 // pred_region
          %156 = dma.done [#allocation6], 64
        $region36: #{tpu_custom_call.1} parent=27 // pred_fallthru
          _
        %s157 = sand.u32 %s28, 1
        %s158 = scalar_lea.sflag [#allocation3], %s157
        %s159 = sand.u32 %s28, 1
        %s160 = smul.addr %s159, 16
        %s161 = scalar_lea.vmem [#allocation2], %s160
        %p162 = pneg %p41
        %p163 = pneg %p38
        %p164 = pneg %p62
        %p165 = pneg %p59
        %p166 = pneg %p88
        %p167 = pneg %p85
        %s168 = sand.u32 %s75, 1
        %s169 = scalar_lea.sflag [#allocation4], %s168
        %s170 = sand.u32 %s75, 1
        %s171 = smul.addr %s170, 16
        %s172 = scalar_lea.vmem [#allocation7], %s171
        %v173 = vld [vmem:[%s148] sm:$0xff]
        %v174 = vld [vmem:[%s148 + $0x8] sm:$0xff]
        %v175 = vadd.f32 %v173, %v174
        %176 = vadd.xlane.f32.xlu0 %v175
        %v177 = vpop.xlane.xlu0 %176
        %v178 = vld [vmem:[#allocation5] sm:$0x7]
        %v180 = vlaneseq
        %v181 = vand.u32 %v180, 127
        %v182 = vadd.s32 %v181, 4294967295
        %v183 = vlaneseq
        %v184 = vshrl.u32 %v183, 7
        %v185 = vsub.s32 %v182, %v184
        %v186 = vrot.slane %v177, %v185
        %vm188 = vcmask 7168
        %v189 = vsel %vm188, 0.0, %v186
        %vm190 = vcmask 72704
        %v191 = vsel %vm190, %v189, 0.0
        %v192 = vmul.f32 %v178, %v191
        %v193 = vadd.f32 %v192, 0.0
        %v195 = vrot.slane %v191, 7
        %196 = vrot.lane.b32.xlu0 %v195, 127
        %v197 = vpop.permute.xlu0 %196
        %v199 = vmul.f32 %v178, %v197
        %v201 = vrot.slane %v199, 1
        %v203 = vadd.f32 %v193, %v201
        %v204 = vrot.slane %v191, 6
        %205 = vrot.lane.b32.xlu0 %v204, 126
        %v206 = vpop.permute.xlu0 %205
        %v208 = vmul.f32 %v178, %v206
        %v210 = vrot.slane %v208, 2
        %v212 = vadd.f32 %v203, %v210
        %v213 = vxor.u32 %v212, 2147483648
        %v214 = vmul.f32 %v213, 1.442695
        %v215 = vpow.pop %v214
        %v216 = vadd.f32 %v215, 1.0
        %v217 = vrcp.pop %v216
        %v218 = vmul.f32 1.0, %v217
        %v219 = vlaneseq
        %v220 = vshrl.u32 %v219, 7
        %v221 = vsub.s32 0, %v220
        %v222 = vrot.slane %v218, %v221
        %224 = vbcast.lane.b32.xlu0 %v222, 256
        %v225 = vpop.permute.xlu0 %224
        %v226 = vmul.f32 %v173, %v225
        %v227 = vmul.f32 %v174, %v225
        %228 = vst [vmem:[%s172] sm:$0xff] %v226
        %229 = vst [vmem:[%s172 + $0x8] sm:$0xff] %v227
        %s230 = sand.u32 %s75, 1
        %s231 = scalar_lea.sflag [#allocation4], %s230
        %s232 = sand.u32 %s75, 1
        %s233 = smul.addr %s232, 16
        %s234 = scalar_lea.vmem [#allocation7], %s233
        // Predicated region
        $region37: #{tpu_custom_call.1} parent=27 // pred_check
          %p235 = pneg %p85
        $region38: #{tpu_custom_call.1} parent=27 // pred_check_branch
          %237 = sbr.rel (%p235) target = $region40
        $region39: #{tpu_custom_call.1} parent=27 // pred_region
          %s239 = ssub.s32 256, 256
          %240 = vsyncadd %s231, %s239
          %s241 = smul.addr %s20, 2
          %s242 = smul.addr %s241, 128
          %s243 = scalar_lea.hbm %s2, %s242
          %s245 = sshll.u32 %s234, 4
          %s246 = int_to_ptr.vmem [resolvable:$true] %s245
          %248 = dma.vmem_to_hbm [thread:$0]  %s246, 256, %s243, %s231
        $region40: #{tpu_custom_call.1} parent=27 // pred_fallthru
          _
      $region28: #{tpu_custom_call.1} parent=5 // pred_fallthru
        _
      %p249 = scmp.le.s32.totalorder 2, %s15
      // Predicated region
      $region41: #{tpu_custom_call.1} parent=5 // pred_check
        %p250 = pneg %p249
      $region42: #{tpu_custom_call.1} parent=5 // pred_check_branch
        %252 = sbr.rel (%p250) target = $region44
      $region43: #{tpu_custom_call.1} parent=5 // pred_region
        %s253 = ssub.s32 %s15, 2
        // Predicated region
        $region45: #{tpu_custom_call.1} parent=43 // pred_check
          %p254 = pneg %p91
        $region46: #{tpu_custom_call.1} parent=43 // pred_check_branch
          %256 = sbr.rel (%p254) target = $region48
        $region47: #{tpu_custom_call.1} parent=43 // pred_region
          %s257 = sand.u32 %s76, 1
          %s258 = scalar_lea.sflag [#allocation4], %s257
          %s259 = sand.u32 %s76, 1
          %s260 = smul.addr %s259, 16
          %s261 = scalar_lea.vmem [#allocation7], %s260
          %262 = dma.done %s258, 256
        $region48: #{tpu_custom_call.1} parent=43 // pred_fallthru
          _
      $region44: #{tpu_custom_call.1} parent=5 // pred_fallthru
        _
    $region6: #{tpu_custom_call.1} parent=1 // loop_footer
      %s19 = sadd.s32 1, %s15
    $region7: #{tpu_custom_call.1} parent=1 // loop_footer_branch
      %14 = sbr.rel target = $region3
    $region8: #{tpu_custom_call.1} parent=1 // loop_exit
      _
    %263 = vsyncpa [#allocation3], 1
    %s264 = scalar_lea.sflag [#allocation3], 1
    %265 = vsyncpa %s264, 1
    %266 = vsyncpa [#allocation6], 1
    %267 = vsyncpa [#allocation4], 1
    %s268 = scalar_lea.sflag [#allocation4], 1
    %269 = vsyncpa %s268, 1

</llo_original>
